<compile_context>
chip_gen: v7x
topology: tpu7x:2x2x1
jax: 0.10.0
libtpu: 0.0.40
codegen_flags: <defaults>
</compile_context>

<pallas_src>
import jax
import jax.numpy as jnp
from jax import lax
from jax.experimental import pallas as pl
from jax.experimental.pallas import tpu as pltpu


def _clip_embeddings_kernel(tok_ids_ref,   # SMEM (B, S) int32   (scalar prefetch)
                            tok_tab_hbm,   # HBM  (vocab, E)     (memory_space=pl.ANY)
                            pos_ref,       # VMEM (S, E)
                            out_ref,       # VMEM (1, S, E)
                            gathered,      # VMEM scratch (2, S, E)
                            sems):         # DMA semaphores (2,)
    b = pl.program_id(0)
    num_b = pl.num_programs(0)
    seq_len = pos_ref.shape[0]

    def issue_gather(batch_idx, slot):
        # One row DMA per token, all signalling the same per-slot semaphore.
        # Unrolled so the LLO scheduler overlaps SMEM id loads and address
        # arithmetic with descriptor pushes.
        def issue_one(s, carry):
            tok = tok_ids_ref[batch_idx, s]
            pltpu.make_async_copy(
                tok_tab_hbm.at[pl.ds(tok, 1), :],
                gathered.at[slot, pl.ds(s, 1), :],
                sems.at[slot],
            ).start()
            return carry

        unroll = True if seq_len <= 64 else 8
        lax.fori_loop(0, seq_len, issue_one, 0, unroll=unroll)

    def wait_gather(slot):
        # Single consolidated wait: DMA semaphores count bytes, and the S row
        # copies above add up to exactly one (S, E) block, so one wait sized
        # (S, E) retires them all (1 wait descriptor instead of S).
        pltpu.make_async_copy(
            tok_tab_hbm.at[pl.ds(0, seq_len), :],
            gathered.at[slot],
            sems.at[slot],
        ).wait()

    slot = lax.rem(b, 2)
    next_slot = 1 - slot

    # Prime the 2-slot ring on the first grid step.
    @pl.when(b == 0)
    def _():
        issue_gather(0, 0)

    # Prefetch the next batch element's rows before consuming this step's data,
    # so its gather overlaps this step's wait, add and output writeback.
    @pl.when(b + 1 < num_b)
    def _():
        issue_gather(b + 1, next_slot)

    wait_gather(slot)

    # Fused broadcast-add of the position embeddings; one lane-dense store.
    out_ref[0] = gathered[slot] + pos_ref[...]


def clip_embeddings_pallas(input_tokens, token_table, pos_table):
    """input_tokens: (B, S) int; token_table: (vocab, E); pos_table: (S, E)."""
    B, S = input_tokens.shape
    P, E = pos_table.shape
    V, E2 = token_table.shape
    assert E == E2
    # PyTorch's `tok_emb + position_embedding.weight` broadcast requires S == num_positions.
    assert S == P, "sequence length must equal num_positions"
    # The consolidated wait descriptor slices rows [0, S) of the token table.
    assert V >= S, "vocab_size must be >= sequence length"

    dtype = token_table.dtype
    itemsize = jnp.dtype(dtype).itemsize

    # Clamp ids so an out-of-range token cannot trigger a DMA bounds fault.
    tokens = jnp.clip(input_tokens.astype(jnp.int32), 0, V - 1)
    pos_table = pos_table.astype(dtype)

    grid_spec = pltpu.PrefetchScalarGridSpec(
        num_scalar_prefetch=1,
        grid=(B,),
        in_specs=[
            pl.BlockSpec(memory_space=pl.ANY),              # token table stays in HBM
            pl.BlockSpec((S, E), lambda b, toks: (0, 0)),   # pos table: fetched once
        ],
        out_specs=pl.BlockSpec((1, S, E), lambda b, toks: (b, 0, 0)),
        scratch_shapes=[
            pltpu.VMEM((2, S, E), dtype),                   # 2-slot gather ring
            pltpu.SemaphoreType.DMA((2,)),
        ],
    )

    cost = pl.CostEstimate(
        flops=B * S * E,                                    # the broadcast add
        transcendentals=0,
        bytes_accessed=(2 * B * S * E + S * E) * itemsize + B * S * 4,
    )

    return pl.pallas_call(
        _clip_embeddings_kernel,
        out_shape=jax.ShapeDtypeStruct((B, S, E), dtype),
        grid_spec=grid_spec,
        cost_estimate=cost,
        # The batch axis carries the 2-slot gather ring, so it must iterate
        # sequentially ("arbitrary").
        compiler_params=pltpu.CompilerParams(
            dimension_semantics=("arbitrary",)),
    )(tokens, token_table, pos_table)


# -------------------- pure-JAX reference (for verification) -----------------
def _ref(input_tokens, token_table, pos_table):
    return token_table[input_tokens] + pos_table[None, :, :]


if __name__ == "__main__":
    # Small shapes consistent with the module; E is a multiple of 128 so the
    # output store is lane-dense (real CLIP widths 512/768/1024/1280 all are).
    B, S, E = 2, 8, 128
    vocab = 512

    key = jax.random.PRNGKey(0)
    k_tok, k_tab, k_pos = jax.random.split(key, 3)
    input_tokens = jax.random.randint(k_tok, (B, S), 0, vocab, dtype=jnp.int32)
    token_table = 0.02 * jax.random.normal(k_tab, (vocab, E), jnp.float32)
    pos_table = 0.01 * jax.random.normal(k_pos, (S, E), jnp.float32)

    out = clip_embeddings_pallas(input_tokens, token_table, pos_table)
    out = jax.block_until_ready(out)

    ref = _ref(input_tokens, token_table, pos_table)
    assert out.shape == (B, S, E)
    assert jnp.allclose(out, ref, atol=1e-6, rtol=1e-6), "mismatch vs reference"

    print("KERNEL_OK")
</pallas_src>

<mosaic_0001>
module attributes {stable_mosaic.version = 11 : i64} {
  func.func @_clip_embeddings_kernel(%arg0: i32, %arg1: memref<2x8xi32, #tpu.memory_space<smem>>, %arg2: memref<512x128xf32, #tpu.memory_space<any>>, %arg3: memref<8x128xf32, #tpu.memory_space<vmem>>, %arg4: memref<1x8x128xf32, #tpu.memory_space<vmem>>, %arg5: memref<2x8x128xf32, #tpu.memory_space<vmem>>, %arg6: memref<2x!tpu.dma_semaphore, #tpu.memory_space<semaphore_mem>>) attributes {dimension_semantics = [#tpu.dimension_semantics<arbitrary>], iteration_bounds = array<i64: 2>, scalar_prefetch = 1 : i64, scratch_operands = 2 : i64, tpu.core_type = #tpu.core_type<tc>, window_params = [{}, {pipeline_mode = #tpu.pipeline_mode<synchronous>, transform_indices = @transform_1, window_bounds = array<i64: 8, 128>}, {transform_indices = @transform_2, window_bounds = array<i64: 1, 8, 128>}]} {
    %c2_i32 = arith.constant 2 : i32
    %0 = arith.remsi %arg0, %c2_i32 : i32
    %c1_i32 = arith.constant 1 : i32
    %1 = arith.subi %c1_i32, %0 : i32
    %c0_i32 = arith.constant 0 : i32
    %2 = arith.cmpi eq, %arg0, %c0_i32 : i32
    %3 = arith.extui %2 : i1 to i32
    %c0_i32_0 = arith.constant 0 : i32
    %4 = arith.cmpi ne, %3, %c0_i32_0 : i32
    scf.if %4 {
      %c0_i32_14 = arith.constant 0 : i32
      %c0_15 = arith.constant 0 : index
      %22 = arith.index_cast %c0_i32_14 : i32 to index
      %23 = memref.load %arg1[%c0_15, %22] : memref<2x8xi32, #tpu.memory_space<smem>>
      %c0_i32_16 = arith.constant 0 : i32
      %c0_i32_17 = arith.constant 0 : i32
      %c0_i32_18 = arith.constant 0 : i32
      %24 = tpu.memref_slice %arg2[%23, %c0_i32_18] : memref<512x128xf32, #tpu.memory_space<any>> -> memref<1x128xf32, #tpu.memory_space<any>>
      %c0_i32_19 = arith.constant 0 : i32
      %25 = tpu.memref_slice %arg5[%c0_i32_16, %c0_i32_14, %c0_i32_19] : memref<2x8x128xf32, #tpu.memory_space<vmem>> -> memref<1x1x128xf32, #tpu.memory_space<vmem>>
      %26 = tpu.memref_squeeze %25 : memref<1x1x128xf32, #tpu.memory_space<vmem>> -> memref<1x128xf32, #tpu.memory_space<vmem>>
      %27 = tpu.memref_slice %arg6[%c0_i32_17] : memref<2x!tpu.dma_semaphore, #tpu.memory_space<semaphore_mem>> -> memref<1x!tpu.dma_semaphore, #tpu.memory_space<semaphore_mem>>
      %28 = tpu.memref_squeeze %27 : memref<1x!tpu.dma_semaphore, #tpu.memory_space<semaphore_mem>> -> memref<!tpu.dma_semaphore, #tpu.memory_space<semaphore_mem>>
      tpu.enqueue_dma source(%24 : memref<1x128xf32, #tpu.memory_space<any>>) target(%26 : memref<1x128xf32, #tpu.memory_space<vmem>>) target_semaphore(%28 : memref<!tpu.dma_semaphore, #tpu.memory_space<semaphore_mem>>)
      %c1_i32_20 = arith.constant 1 : i32
      %c0_21 = arith.constant 0 : index
      %29 = arith.index_cast %c1_i32_20 : i32 to index
      %30 = memref.load %arg1[%c0_21, %29] : memref<2x8xi32, #tpu.memory_space<smem>>
      %c0_i32_22 = arith.constant 0 : i32
      %c0_i32_23 = arith.constant 0 : i32
      %c0_i32_24 = arith.constant 0 : i32
      %31 = tpu.memref_slice %arg2[%30, %c0_i32_24] : memref<512x128xf32, #tpu.memory_space<any>> -> memref<1x128xf32, #tpu.memory_space<any>>
      %c0_i32_25 = arith.constant 0 : i32
      %32 = tpu.memref_slice %arg5[%c0_i32_22, %c1_i32_20, %c0_i32_25] : memref<2x8x128xf32, #tpu.memory_space<vmem>> -> memref<1x1x128xf32, #tpu.memory_space<vmem>>
      %33 = tpu.memref_squeeze %32 : memref<1x1x128xf32, #tpu.memory_space<vmem>> -> memref<1x128xf32, #tpu.memory_space<vmem>>
      %34 = tpu.memref_slice %arg6[%c0_i32_23] : memref<2x!tpu.dma_semaphore, #tpu.memory_space<semaphore_mem>> -> memref<1x!tpu.dma_semaphore, #tpu.memory_space<semaphore_mem>>
      %35 = tpu.memref_squeeze %34 : memref<1x!tpu.dma_semaphore, #tpu.memory_space<semaphore_mem>> -> memref<!tpu.dma_semaphore, #tpu.memory_space<semaphore_mem>>
      tpu.enqueue_dma source(%31 : memref<1x128xf32, #tpu.memory_space<any>>) target(%33 : memref<1x128xf32, #tpu.memory_space<vmem>>) target_semaphore(%35 : memref<!tpu.dma_semaphore, #tpu.memory_space<semaphore_mem>>)
      %c2_i32_26 = arith.constant 2 : i32
      %c0_27 = arith.constant 0 : index
      %36 = arith.index_cast %c2_i32_26 : i32 to index
      %37 = memref.load %arg1[%c0_27, %36] : memref<2x8xi32, #tpu.memory_space<smem>>
      %c0_i32_28 = arith.constant 0 : i32
      %c0_i32_29 = arith.constant 0 : i32
      %c0_i32_30 = arith.constant 0 : i32
      %38 = tpu.memref_slice %arg2[%37, %c0_i32_30] : memref<512x128xf32, #tpu.memory_space<any>> -> memref<1x128xf32, #tpu.memory_space<any>>
      %c0_i32_31 = arith.constant 0 : i32
      %39 = tpu.memref_slice %arg5[%c0_i32_28, %c2_i32_26, %c0_i32_31] : memref<2x8x128xf32, #tpu.memory_space<vmem>> -> memref<1x1x128xf32, #tpu.memory_space<vmem>>
      %40 = tpu.memref_squeeze %39 : memref<1x1x128xf32, #tpu.memory_space<vmem>> -> memref<1x128xf32, #tpu.memory_space<vmem>>
      %41 = tpu.memref_slice %arg6[%c0_i32_29] : memref<2x!tpu.dma_semaphore, #tpu.memory_space<semaphore_mem>> -> memref<1x!tpu.dma_semaphore, #tpu.memory_space<semaphore_mem>>
      %42 = tpu.memref_squeeze %41 : memref<1x!tpu.dma_semaphore, #tpu.memory_space<semaphore_mem>> -> memref<!tpu.dma_semaphore, #tpu.memory_space<semaphore_mem>>
      tpu.enqueue_dma source(%38 : memref<1x128xf32, #tpu.memory_space<any>>) target(%40 : memref<1x128xf32, #tpu.memory_space<vmem>>) target_semaphore(%42 : memref<!tpu.dma_semaphore, #tpu.memory_space<semaphore_mem>>)
      %c3_i32 = arith.constant 3 : i32
      %c0_32 = arith.constant 0 : index
      %43 = arith.index_cast %c3_i32 : i32 to index
      %44 = memref.load %arg1[%c0_32, %43] : memref<2x8xi32, #tpu.memory_space<smem>>
      %c0_i32_33 = arith.constant 0 : i32
      %c0_i32_34 = arith.constant 0 : i32
      %c0_i32_35 = arith.constant 0 : i32
      %45 = tpu.memref_slice %arg2[%44, %c0_i32_35] : memref<512x128xf32, #tpu.memory_space<any>> -> memref<1x128xf32, #tpu.memory_space<any>>
      %c0_i32_36 = arith.constant 0 : i32
      %46 = tpu.memref_slice %arg5[%c0_i32_33, %c3_i32, %c0_i32_36] : memref<2x8x128xf32, #tpu.memory_space<vmem>> -> memref<1x1x128xf32, #tpu.memory_space<vmem>>
      %47 = tpu.memref_squeeze %46 : memref<1x1x128xf32, #tpu.memory_space<vmem>> -> memref<1x128xf32, #tpu.memory_space<vmem>>
      %48 = tpu.memref_slice %arg6[%c0_i32_34] : memref<2x!tpu.dma_semaphore, #tpu.memory_space<semaphore_mem>> -> memref<1x!tpu.dma_semaphore, #tpu.memory_space<semaphore_mem>>
      %49 = tpu.memref_squeeze %48 : memref<1x!tpu.dma_semaphore, #tpu.memory_space<semaphore_mem>> -> memref<!tpu.dma_semaphore, #tpu.memory_space<semaphore_mem>>
      tpu.enqueue_dma source(%45 : memref<1x128xf32, #tpu.memory_space<any>>) target(%47 : memref<1x128xf32, #tpu.memory_space<vmem>>) target_semaphore(%49 : memref<!tpu.dma_semaphore, #tpu.memory_space<semaphore_mem>>)
      %c4_i32 = arith.constant 4 : i32
      %c0_37 = arith.constant 0 : index
      %50 = arith.index_cast %c4_i32 : i32 to index
      %51 = memref.load %arg1[%c0_37, %50] : memref<2x8xi32, #tpu.memory_space<smem>>
      %c0_i32_38 = arith.constant 0 : i32
      %c0_i32_39 = arith.constant 0 : i32
      %c0_i32_40 = arith.constant 0 : i32
      %52 = tpu.memref_slice %arg2[%51, %c0_i32_40] : memref<512x128xf32, #tpu.memory_space<any>> -> memref<1x128xf32, #tpu.memory_space<any>>
      %c0_i32_41 = arith.constant 0 : i32
      %53 = tpu.memref_slice %arg5[%c0_i32_38, %c4_i32, %c0_i32_41] : memref<2x8x128xf32, #tpu.memory_space<vmem>> -> memref<1x1x128xf32, #tpu.memory_space<vmem>>
      %54 = tpu.memref_squeeze %53 : memref<1x1x128xf32, #tpu.memory_space<vmem>> -> memref<1x128xf32, #tpu.memory_space<vmem>>
      %55 = tpu.memref_slice %arg6[%c0_i32_39] : memref<2x!tpu.dma_semaphore, #tpu.memory_space<semaphore_mem>> -> memref<1x!tpu.dma_semaphore, #tpu.memory_space<semaphore_mem>>
      %56 = tpu.memref_squeeze %55 : memref<1x!tpu.dma_semaphore, #tpu.memory_space<semaphore_mem>> -> memref<!tpu.dma_semaphore, #tpu.memory_space<semaphore_mem>>
      tpu.enqueue_dma source(%52 : memref<1x128xf32, #tpu.memory_space<any>>) target(%54 : memref<1x128xf32, #tpu.memory_space<vmem>>) target_semaphore(%56 : memref<!tpu.dma_semaphore, #tpu.memory_space<semaphore_mem>>)
      %c5_i32 = arith.constant 5 : i32
      %c0_42 = arith.constant 0 : index
      %57 = arith.index_cast %c5_i32 : i32 to index
      %58 = memref.load %arg1[%c0_42, %57] : memref<2x8xi32, #tpu.memory_space<smem>>
      %c0_i32_43 = arith.constant 0 : i32
      %c0_i32_44 = arith.constant 0 : i32
      %c0_i32_45 = arith.constant 0 : i32
      %59 = tpu.memref_slice %arg2[%58, %c0_i32_45] : memref<512x128xf32, #tpu.memory_space<any>> -> memref<1x128xf32, #tpu.memory_space<any>>
      %c0_i32_46 = arith.constant 0 : i32
      %60 = tpu.memref_slice %arg5[%c0_i32_43, %c5_i32, %c0_i32_46] : memref<2x8x128xf32, #tpu.memory_space<vmem>> -> memref<1x1x128xf32, #tpu.memory_space<vmem>>
      %61 = tpu.memref_squeeze %60 : memref<1x1x128xf32, #tpu.memory_space<vmem>> -> memref<1x128xf32, #tpu.memory_space<vmem>>
      %62 = tpu.memref_slice %arg6[%c0_i32_44] : memref<2x!tpu.dma_semaphore, #tpu.memory_space<semaphore_mem>> -> memref<1x!tpu.dma_semaphore, #tpu.memory_space<semaphore_mem>>
      %63 = tpu.memref_squeeze %62 : memref<1x!tpu.dma_semaphore, #tpu.memory_space<semaphore_mem>> -> memref<!tpu.dma_semaphore, #tpu.memory_space<semaphore_mem>>
      tpu.enqueue_dma source(%59 : memref<1x128xf32, #tpu.memory_space<any>>) target(%61 : memref<1x128xf32, #tpu.memory_space<vmem>>) target_semaphore(%63 : memref<!tpu.dma_semaphore, #tpu.memory_space<semaphore_mem>>)
      %c6_i32 = arith.constant 6 : i32
      %c0_47 = arith.constant 0 : index
      %64 = arith.index_cast %c6_i32 : i32 to index
      %65 = memref.load %arg1[%c0_47, %64] : memref<2x8xi32, #tpu.memory_space<smem>>
      %c0_i32_48 = arith.constant 0 : i32
      %c0_i32_49 = arith.constant 0 : i32
      %c0_i32_50 = arith.constant 0 : i32
      %66 = tpu.memref_slice %arg2[%65, %c0_i32_50] : memref<512x128xf32, #tpu.memory_space<any>> -> memref<1x128xf32, #tpu.memory_space<any>>
      %c0_i32_51 = arith.constant 0 : i32
      %67 = tpu.memref_slice %arg5[%c0_i32_48, %c6_i32, %c0_i32_51] : memref<2x8x128xf32, #tpu.memory_space<vmem>> -> memref<1x1x128xf32, #tpu.memory_space<vmem>>
      %68 = tpu.memref_squeeze %67 : memref<1x1x128xf32, #tpu.memory_space<vmem>> -> memref<1x128xf32, #tpu.memory_space<vmem>>
      %69 = tpu.memref_slice %arg6[%c0_i32_49] : memref<2x!tpu.dma_semaphore, #tpu.memory_space<semaphore_mem>> -> memref<1x!tpu.dma_semaphore, #tpu.memory_space<semaphore_mem>>
      %70 = tpu.memref_squeeze %69 : memref<1x!tpu.dma_semaphore, #tpu.memory_space<semaphore_mem>> -> memref<!tpu.dma_semaphore, #tpu.memory_space<semaphore_mem>>
      tpu.enqueue_dma source(%66 : memref<1x128xf32, #tpu.memory_space<any>>) target(%68 : memref<1x128xf32, #tpu.memory_space<vmem>>) target_semaphore(%70 : memref<!tpu.dma_semaphore, #tpu.memory_space<semaphore_mem>>)
      %c7_i32 = arith.constant 7 : i32
      %c0_52 = arith.constant 0 : index
      %71 = arith.index_cast %c7_i32 : i32 to index
      %72 = memref.load %arg1[%c0_52, %71] : memref<2x8xi32, #tpu.memory_space<smem>>
      %c0_i32_53 = arith.constant 0 : i32
      %c0_i32_54 = arith.constant 0 : i32
      %c0_i32_55 = arith.constant 0 : i32
      %73 = tpu.memref_slice %arg2[%72, %c0_i32_55] : memref<512x128xf32, #tpu.memory_space<any>> -> memref<1x128xf32, #tpu.memory_space<any>>
      %c0_i32_56 = arith.constant 0 : i32
      %74 = tpu.memref_slice %arg5[%c0_i32_53, %c7_i32, %c0_i32_56] : memref<2x8x128xf32, #tpu.memory_space<vmem>> -> memref<1x1x128xf32, #tpu.memory_space<vmem>>
      %75 = tpu.memref_squeeze %74 : memref<1x1x128xf32, #tpu.memory_space<vmem>> -> memref<1x128xf32, #tpu.memory_space<vmem>>
      %76 = tpu.memref_slice %arg6[%c0_i32_54] : memref<2x!tpu.dma_semaphore, #tpu.memory_space<semaphore_mem>> -> memref<1x!tpu.dma_semaphore, #tpu.memory_space<semaphore_mem>>
      %77 = tpu.memref_squeeze %76 : memref<1x!tpu.dma_semaphore, #tpu.memory_space<semaphore_mem>> -> memref<!tpu.dma_semaphore, #tpu.memory_space<semaphore_mem>>
      tpu.enqueue_dma source(%73 : memref<1x128xf32, #tpu.memory_space<any>>) target(%75 : memref<1x128xf32, #tpu.memory_space<vmem>>) target_semaphore(%77 : memref<!tpu.dma_semaphore, #tpu.memory_space<semaphore_mem>>)
      %c8_i32 = arith.constant 8 : i32
    } else {
    }
    %c1_i32_1 = arith.constant 1 : i32
    %5 = arith.addi %arg0, %c1_i32_1 : i32
    %c2_i32_2 = arith.constant 2 : i32
    %6 = arith.cmpi slt, %5, %c2_i32_2 : i32
    %7 = arith.extui %6 : i1 to i32
    %c0_i32_3 = arith.constant 0 : i32
    %8 = arith.cmpi ne, %7, %c0_i32_3 : i32
    scf.if %8 {
      %c1_i32_14 = arith.constant 1 : i32
      %22 = arith.addi %arg0, %c1_i32_14 : i32
      %c0_i32_15 = arith.constant 0 : i32
      %23 = arith.index_cast %22 : i32 to index
      %24 = arith.index_cast %c0_i32_15 : i32 to index
      %25 = memref.load %arg1[%23, %24] : memref<2x8xi32, #tpu.memory_space<smem>>
      %c0_i32_16 = arith.constant 0 : i32
      %26 = tpu.memref_slice %arg2[%25, %c0_i32_16] : memref<512x128xf32, #tpu.memory_space<any>> -> memref<1x128xf32, #tpu.memory_space<any>>
      %c0_i32_17 = arith.constant 0 : i32
      %27 = tpu.memref_slice %arg5[%1, %c0_i32_15, %c0_i32_17] : memref<2x8x128xf32, #tpu.memory_space<vmem>> -> memref<1x1x128xf32, #tpu.memory_space<vmem>>
      %28 = tpu.memref_squeeze %27 : memref<1x1x128xf32, #tpu.memory_space<vmem>> -> memref<1x128xf32, #tpu.memory_space<vmem>>
      %29 = tpu.memref_slice %arg6[%1] : memref<2x!tpu.dma_semaphore, #tpu.memory_space<semaphore_mem>> -> memref<1x!tpu.dma_semaphore, #tpu.memory_space<semaphore_mem>>
      %30 = tpu.memref_squeeze %29 : memref<1x!tpu.dma_semaphore, #tpu.memory_space<semaphore_mem>> -> memref<!tpu.dma_semaphore, #tpu.memory_space<semaphore_mem>>
      tpu.enqueue_dma source(%26 : memref<1x128xf32, #tpu.memory_space<any>>) target(%28 : memref<1x128xf32, #tpu.memory_space<vmem>>) target_semaphore(%30 : memref<!tpu.dma_semaphore, #tpu.memory_space<semaphore_mem>>)
      %c1_i32_18 = arith.constant 1 : i32
      %31 = arith.index_cast %22 : i32 to index
      %32 = arith.index_cast %c1_i32_18 : i32 to index
      %33 = memref.load %arg1[%31, %32] : memref<2x8xi32, #tpu.memory_space<smem>>
      %c0_i32_19 = arith.constant 0 : i32
      %34 = tpu.memref_slice %arg2[%33, %c0_i32_19] : memref<512x128xf32, #tpu.memory_space<any>> -> memref<1x128xf32, #tpu.memory_space<any>>
      %c0_i32_20 = arith.constant 0 : i32
      %35 = tpu.memref_slice %arg5[%1, %c1_i32_18, %c0_i32_20] : memref<2x8x128xf32, #tpu.memory_space<vmem>> -> memref<1x1x128xf32, #tpu.memory_space<vmem>>
      %36 = tpu.memref_squeeze %35 : memref<1x1x128xf32, #tpu.memory_space<vmem>> -> memref<1x128xf32, #tpu.memory_space<vmem>>
      %37 = tpu.memref_slice %arg6[%1] : memref<2x!tpu.dma_semaphore, #tpu.memory_space<semaphore_mem>> -> memref<1x!tpu.dma_semaphore, #tpu.memory_space<semaphore_mem>>
      %38 = tpu.memref_squeeze %37 : memref<1x!tpu.dma_semaphore, #tpu.memory_space<semaphore_mem>> -> memref<!tpu.dma_semaphore, #tpu.memory_space<semaphore_mem>>
      tpu.enqueue_dma source(%34 : memref<1x128xf32, #tpu.memory_space<any>>) target(%36 : memref<1x128xf32, #tpu.memory_space<vmem>>) target_semaphore(%38 : memref<!tpu.dma_semaphore, #tpu.memory_space<semaphore_mem>>)
      %c2_i32_21 = arith.constant 2 : i32
      %39 = arith.index_cast %22 : i32 to index
      %40 = arith.index_cast %c2_i32_21 : i32 to index
      %41 = memref.load %arg1[%39, %40] : memref<2x8xi32, #tpu.memory_space<smem>>
      %c0_i32_22 = arith.constant 0 : i32
      %42 = tpu.memref_slice %arg2[%41, %c0_i32_22] : memref<512x128xf32, #tpu.memory_space<any>> -> memref<1x128xf32, #tpu.memory_space<any>>
      %c0_i32_23 = arith.constant 0 : i32
      %43 = tpu.memref_slice %arg5[%1, %c2_i32_21, %c0_i32_23] : memref<2x8x128xf32, #tpu.memory_space<vmem>> -> memref<1x1x128xf32, #tpu.memory_space<vmem>>
      %44 = tpu.memref_squeeze %43 : memref<1x1x128xf32, #tpu.memory_space<vmem>> -> memref<1x128xf32, #tpu.memory_space<vmem>>
      %45 = tpu.memref_slice %arg6[%1] : memref<2x!tpu.dma_semaphore, #tpu.memory_space<semaphore_mem>> -> memref<1x!tpu.dma_semaphore, #tpu.memory_space<semaphore_mem>>
      %46 = tpu.memref_squeeze %45 : memref<1x!tpu.dma_semaphore, #tpu.memory_space<semaphore_mem>> -> memref<!tpu.dma_semaphore, #tpu.memory_space<semaphore_mem>>
      tpu.enqueue_dma source(%42 : memref<1x128xf32, #tpu.memory_space<any>>) target(%44 : memref<1x128xf32, #tpu.memory_space<vmem>>) target_semaphore(%46 : memref<!tpu.dma_semaphore, #tpu.memory_space<semaphore_mem>>)
      %c3_i32 = arith.constant 3 : i32
      %47 = arith.index_cast %22 : i32 to index
      %48 = arith.index_cast %c3_i32 : i32 to index
      %49 = memref.load %arg1[%47, %48] : memref<2x8xi32, #tpu.memory_space<smem>>
      %c0_i32_24 = arith.constant 0 : i32
      %50 = tpu.memref_slice %arg2[%49, %c0_i32_24] : memref<512x128xf32, #tpu.memory_space<any>> -> memref<1x128xf32, #tpu.memory_space<any>>
      %c0_i32_25 = arith.constant 0 : i32
      %51 = tpu.memref_slice %arg5[%1, %c3_i32, %c0_i32_25] : memref<2x8x128xf32, #tpu.memory_space<vmem>> -> memref<1x1x128xf32, #tpu.memory_space<vmem>>
      %52 = tpu.memref_squeeze %51 : memref<1x1x128xf32, #tpu.memory_space<vmem>> -> memref<1x128xf32, #tpu.memory_space<vmem>>
      %53 = tpu.memref_slice %arg6[%1] : memref<2x!tpu.dma_semaphore, #tpu.memory_space<semaphore_mem>> -> memref<1x!tpu.dma_semaphore, #tpu.memory_space<semaphore_mem>>
      %54 = tpu.memref_squeeze %53 : memref<1x!tpu.dma_semaphore, #tpu.memory_space<semaphore_mem>> -> memref<!tpu.dma_semaphore, #tpu.memory_space<semaphore_mem>>
      tpu.enqueue_dma source(%50 : memref<1x128xf32, #tpu.memory_space<any>>) target(%52 : memref<1x128xf32, #tpu.memory_space<vmem>>) target_semaphore(%54 : memref<!tpu.dma_semaphore, #tpu.memory_space<semaphore_mem>>)
      %c4_i32 = arith.constant 4 : i32
      %55 = arith.index_cast %22 : i32 to index
      %56 = arith.index_cast %c4_i32 : i32 to index
      %57 = memref.load %arg1[%55, %56] : memref<2x8xi32, #tpu.memory_space<smem>>
      %c0_i32_26 = arith.constant 0 : i32
      %58 = tpu.memref_slice %arg2[%57, %c0_i32_26] : memref<512x128xf32, #tpu.memory_space<any>> -> memref<1x128xf32, #tpu.memory_space<any>>
      %c0_i32_27 = arith.constant 0 : i32
      %59 = tpu.memref_slice %arg5[%1, %c4_i32, %c0_i32_27] : memref<2x8x128xf32, #tpu.memory_space<vmem>> -> memref<1x1x128xf32, #tpu.memory_space<vmem>>
      %60 = tpu.memref_squeeze %59 : memref<1x1x128xf32, #tpu.memory_space<vmem>> -> memref<1x128xf32, #tpu.memory_space<vmem>>
      %61 = tpu.memref_slice %arg6[%1] : memref<2x!tpu.dma_semaphore, #tpu.memory_space<semaphore_mem>> -> memref<1x!tpu.dma_semaphore, #tpu.memory_space<semaphore_mem>>
      %62 = tpu.memref_squeeze %61 : memref<1x!tpu.dma_semaphore, #tpu.memory_space<semaphore_mem>> -> memref<!tpu.dma_semaphore, #tpu.memory_space<semaphore_mem>>
      tpu.enqueue_dma source(%58 : memref<1x128xf32, #tpu.memory_space<any>>) target(%60 : memref<1x128xf32, #tpu.memory_space<vmem>>) target_semaphore(%62 : memref<!tpu.dma_semaphore, #tpu.memory_space<semaphore_mem>>)
      %c5_i32 = arith.constant 5 : i32
      %63 = arith.index_cast %22 : i32 to index
      %64 = arith.index_cast %c5_i32 : i32 to index
      %65 = memref.load %arg1[%63, %64] : memref<2x8xi32, #tpu.memory_space<smem>>
      %c0_i32_28 = arith.constant 0 : i32
      %66 = tpu.memref_slice %arg2[%65, %c0_i32_28] : memref<512x128xf32, #tpu.memory_space<any>> -> memref<1x128xf32, #tpu.memory_space<any>>
      %c0_i32_29 = arith.constant 0 : i32
      %67 = tpu.memref_slice %arg5[%1, %c5_i32, %c0_i32_29] : memref<2x8x128xf32, #tpu.memory_space<vmem>> -> memref<1x1x128xf32, #tpu.memory_space<vmem>>
      %68 = tpu.memref_squeeze %67 : memref<1x1x128xf32, #tpu.memory_space<vmem>> -> memref<1x128xf32, #tpu.memory_space<vmem>>
      %69 = tpu.memref_slice %arg6[%1] : memref<2x!tpu.dma_semaphore, #tpu.memory_space<semaphore_mem>> -> memref<1x!tpu.dma_semaphore, #tpu.memory_space<semaphore_mem>>
      %70 = tpu.memref_squeeze %69 : memref<1x!tpu.dma_semaphore, #tpu.memory_space<semaphore_mem>> -> memref<!tpu.dma_semaphore, #tpu.memory_space<semaphore_mem>>
      tpu.enqueue_dma source(%66 : memref<1x128xf32, #tpu.memory_space<any>>) target(%68 : memref<1x128xf32, #tpu.memory_space<vmem>>) target_semaphore(%70 : memref<!tpu.dma_semaphore, #tpu.memory_space<semaphore_mem>>)
      %c6_i32 = arith.constant 6 : i32
      %71 = arith.index_cast %22 : i32 to index
      %72 = arith.index_cast %c6_i32 : i32 to index
      %73 = memref.load %arg1[%71, %72] : memref<2x8xi32, #tpu.memory_space<smem>>
      %c0_i32_30 = arith.constant 0 : i32
      %74 = tpu.memref_slice %arg2[%73, %c0_i32_30] : memref<512x128xf32, #tpu.memory_space<any>> -> memref<1x128xf32, #tpu.memory_space<any>>
      %c0_i32_31 = arith.constant 0 : i32
      %75 = tpu.memref_slice %arg5[%1, %c6_i32, %c0_i32_31] : memref<2x8x128xf32, #tpu.memory_space<vmem>> -> memref<1x1x128xf32, #tpu.memory_space<vmem>>
      %76 = tpu.memref_squeeze %75 : memref<1x1x128xf32, #tpu.memory_space<vmem>> -> memref<1x128xf32, #tpu.memory_space<vmem>>
      %77 = tpu.memref_slice %arg6[%1] : memref<2x!tpu.dma_semaphore, #tpu.memory_space<semaphore_mem>> -> memref<1x!tpu.dma_semaphore, #tpu.memory_space<semaphore_mem>>
      %78 = tpu.memref_squeeze %77 : memref<1x!tpu.dma_semaphore, #tpu.memory_space<semaphore_mem>> -> memref<!tpu.dma_semaphore, #tpu.memory_space<semaphore_mem>>
      tpu.enqueue_dma source(%74 : memref<1x128xf32, #tpu.memory_space<any>>) target(%76 : memref<1x128xf32, #tpu.memory_space<vmem>>) target_semaphore(%78 : memref<!tpu.dma_semaphore, #tpu.memory_space<semaphore_mem>>)
      %c7_i32 = arith.constant 7 : i32
      %79 = arith.index_cast %22 : i32 to index
      %80 = arith.index_cast %c7_i32 : i32 to index
      %81 = memref.load %arg1[%79, %80] : memref<2x8xi32, #tpu.memory_space<smem>>
      %c0_i32_32 = arith.constant 0 : i32
      %82 = tpu.memref_slice %arg2[%81, %c0_i32_32] : memref<512x128xf32, #tpu.memory_space<any>> -> memref<1x128xf32, #tpu.memory_space<any>>
      %c0_i32_33 = arith.constant 0 : i32
      %83 = tpu.memref_slice %arg5[%1, %c7_i32, %c0_i32_33] : memref<2x8x128xf32, #tpu.memory_space<vmem>> -> memref<1x1x128xf32, #tpu.memory_space<vmem>>
      %84 = tpu.memref_squeeze %83 : memref<1x1x128xf32, #tpu.memory_space<vmem>> -> memref<1x128xf32, #tpu.memory_space<vmem>>
      %85 = tpu.memref_slice %arg6[%1] : memref<2x!tpu.dma_semaphore, #tpu.memory_space<semaphore_mem>> -> memref<1x!tpu.dma_semaphore, #tpu.memory_space<semaphore_mem>>
      %86 = tpu.memref_squeeze %85 : memref<1x!tpu.dma_semaphore, #tpu.memory_space<semaphore_mem>> -> memref<!tpu.dma_semaphore, #tpu.memory_space<semaphore_mem>>
      tpu.enqueue_dma source(%82 : memref<1x128xf32, #tpu.memory_space<any>>) target(%84 : memref<1x128xf32, #tpu.memory_space<vmem>>) target_semaphore(%86 : memref<!tpu.dma_semaphore, #tpu.memory_space<semaphore_mem>>)
      %c8_i32 = arith.constant 8 : i32
    } else {
    }
    %c0_i32_4 = arith.constant 0 : i32
    %c0_i32_5 = arith.constant 0 : i32
    %9 = tpu.memref_slice %arg2[%c0_i32_4, %c0_i32_5] : memref<512x128xf32, #tpu.memory_space<any>> -> memref<8x128xf32, #tpu.memory_space<any>>
    %c0_i32_6 = arith.constant 0 : i32
    %c0_i32_7 = arith.constant 0 : i32
    %10 = tpu.memref_slice %arg5[%0, %c0_i32_6, %c0_i32_7] : memref<2x8x128xf32, #tpu.memory_space<vmem>> -> memref<1x8x128xf32, #tpu.memory_space<vmem>>
    %11 = tpu.memref_squeeze %10 : memref<1x8x128xf32, #tpu.memory_space<vmem>> -> memref<8x128xf32, #tpu.memory_space<vmem>>
    %12 = tpu.memref_slice %arg6[%0] : memref<2x!tpu.dma_semaphore, #tpu.memory_space<semaphore_mem>> -> memref<1x!tpu.dma_semaphore, #tpu.memory_space<semaphore_mem>>
    %13 = tpu.memref_squeeze %12 : memref<1x!tpu.dma_semaphore, #tpu.memory_space<semaphore_mem>> -> memref<!tpu.dma_semaphore, #tpu.memory_space<semaphore_mem>>
    tpu.wait_dma2 semaphore(%13 : memref<!tpu.dma_semaphore, #tpu.memory_space<semaphore_mem>>) src(%9 : memref<8x128xf32, #tpu.memory_space<any>>) dst(%11 : memref<8x128xf32, #tpu.memory_space<vmem>>)
    %14 = arith.index_cast %0 : i32 to index
    %c0 = arith.constant 0 : index
    %c0_8 = arith.constant 0 : index
    %15 = vector.load %arg5[%14, %c0, %c0_8] : memref<2x8x128xf32, #tpu.memory_space<vmem>>, vector<1x8x128xf32>
    %16 = vector.shape_cast %15 : vector<1x8x128xf32> to vector<8x128xf32>
    %c0_9 = arith.constant 0 : index
    %c0_10 = arith.constant 0 : index
    %17 = vector.load %arg3[%c0_9, %c0_10] : memref<8x128xf32, #tpu.memory_space<vmem>>, vector<8x128xf32>
    %18 = arith.addf %16, %17 : vector<8x128xf32>
    %c0_11 = arith.constant 0 : index
    %c0_12 = arith.constant 0 : index
    %c0_13 = arith.constant 0 : index
    %19 = vector.load %arg4[%c0_11, %c0_12, %c0_13] : memref<1x8x128xf32, #tpu.memory_space<vmem>>, vector<1x8x128xf32>
    %20 = vector.shape_cast %19 : vector<1x8x128xf32> to vector<8x128xf32>
    %21 = vector.shape_cast %18 : vector<8x128xf32> to vector<1x8x128xf32>
    tpu.vector_store %arg4[%c0_11, %c0_12, %c0_13], %21 {strides = array<i32>} : memref<1x8x128xf32, #tpu.memory_space<vmem>>, vector<1x8x128xf32>,
    return
  }
  func.func @transform_1(%arg0: i32, %arg1: memref<2x8xi32, #tpu.memory_space<smem>>) -> (i32, i32) {
    %c0_i32 = arith.constant 0 : i32
    %c0_i32_0 = arith.constant 0 : i32
    %c0_i32_1 = arith.constant 0 : i32
    return %c0_i32, %c0_i32_0 : i32, i32
  }
  func.func @transform_2(%arg0: i32, %arg1: memref<2x8xi32, #tpu.memory_space<smem>>) -> (i32, i32, i32) {
    %c0_i32 = arith.constant 0 : i32
    %c0_i32_0 = arith.constant 0 : i32
    %c0_i32_1 = arith.constant 0 : i32
    return %arg0, %c0_i32, %c0_i32_0 : i32, i32, i32
  }
}

</mosaic_0001>

<llo_original>
// kernel: tpu_custom_call.1
$region0: #{tpu_custom_call.1}
  #allocation0 [shape = 'u32[]', space=smem, size = 0x4, offset = 0x4, fixed_abs, tag = 'smem constant byte address 0x4 - core index']
  #allocation1 [shape = 'u32[144,128]{1,0:T(1,128)}', space=vmem, size = 0x12000, scoped, tag = 'internal scratch']
  #allocation2 [shape = 'f32[2,8,128]{2,1,0:T(8,128)}', space=vmem, size = 0x2000, scoped, tag = 'scratch operand']
  #allocation3 [shape = 's32[2]{0}', space=sflag, size = 0x8, scoped, tag = 'scratch operand']
  #allocation4 [shape = 's32[1]{0}', space=sflag, size = 0x4, scoped, tag = 'scoped memory for tpu_custom_call.1']
  #allocation5 [shape = 'u8[1024]{0}', space=smem, size = 0x400, scoped, tag = 'prefetched SMEM operand 0']
  #allocation10 [shape = 's32[]', space=sflag, size = 0x4, offset = 0, fixed_abs, tag = 'sflag constant byte address 0x0 - dummy sync flag']
  #allocation11 [shape = 's32[]', space=sflag, size = 0x4, offset = 0, fixed_abs, tag = 'sflag constant byte address 0x0 - dummy sync flag']
  #allocation12 [shape = 'u32[]', space=smem, size = 0x4, offset = 0x44, fixed_abs, tag = 'smem constant byte address 0x44 - assertion arg 0']
  #allocation13 [shape = 'u32[]', space=smem, size = 0x4, offset = 0x48, fixed_abs, tag = 'smem constant byte address 0x48 - assertion arg 1']
  #allocation14 [shape = 's32[]', space=sflag, size = 0x4, offset = 0, fixed_abs, tag = 'sflag constant byte address 0x0 - dummy sync flag']
  #allocation15 [shape = 's32[]', space=sflag, size = 0x4, offset = 0, fixed_abs, tag = 'sflag constant byte address 0x0 - dummy sync flag']
  #allocation16 [shape = 's32[]', space=sflag, size = 0x4, offset = 0, fixed_abs, tag = 'sflag constant byte address 0x0 - dummy sync flag']
  #allocation17 [shape = 's32[]', space=sflag, size = 0x4, offset = 0, fixed_abs, tag = 'sflag constant byte address 0x0 - dummy sync flag']
  #allocation18 [shape = 's32[]', space=sflag, size = 0x4, offset = 0, fixed_abs, tag = 'sflag constant byte address 0x0 - dummy sync flag']
  #allocation19 [shape = 's32[]', space=sflag, size = 0x4, offset = 0, fixed_abs, tag = 'sflag constant byte address 0x0 - dummy sync flag']
  #allocation20 [shape = 's32[]', space=sflag, size = 0x4, offset = 0, fixed_abs, tag = 'sflag constant byte address 0x0 - dummy sync flag']
  #allocation21 [shape = 's32[]', space=sflag, size = 0x4, offset = 0, fixed_abs, tag = 'sflag constant byte address 0x0 - dummy sync flag']
  #allocation22 [shape = 's32[]', space=sflag, size = 0x4, offset = 0, fixed_abs, tag = 'sflag constant byte address 0x0 - dummy sync flag']
  #allocation23 [shape = 's32[]', space=sflag, size = 0x4, offset = 0, fixed_abs, tag = 'sflag constant byte address 0x0 - dummy sync flag']
  #allocation24 [shape = 's32[]', space=sflag, size = 0x4, offset = 0, fixed_abs, tag = 'sflag constant byte address 0x0 - dummy sync flag']
  #allocation25 [shape = 's32[]', space=sflag, size = 0x4, offset = 0, fixed_abs, tag = 'sflag constant byte address 0x0 - dummy sync flag']
  #allocation26 [shape = 's32[]', space=sflag, size = 0x4, offset = 0, fixed_abs, tag = 'sflag constant byte address 0x0 - dummy sync flag']
  #allocation27 [shape = 's32[]', space=sflag, size = 0x4, offset = 0, fixed_abs, tag = 'sflag constant byte address 0x0 - dummy sync flag']
  #allocation28 [shape = 's32[]', space=sflag, size = 0x4, offset = 0, fixed_abs, tag = 'sflag constant byte address 0x0 - dummy sync flag']
  #allocation29 [shape = 's32[]', space=sflag, size = 0x4, offset = 0, fixed_abs, tag = 'sflag constant byte address 0x0 - dummy sync flag']
  #allocation30 [shape = 's32[]', space=sflag, size = 0x4, offset = 0, fixed_abs, tag = 'sflag constant byte address 0x0 - dummy sync flag']
  #allocation31 [shape = 's32[]', space=sflag, size = 0x4, offset = 0, fixed_abs, tag = 'sflag constant byte address 0x0 - dummy sync flag']
  #allocation32 [shape = 's32[]', space=sflag, size = 0x4, offset = 0, fixed_abs, tag = 'sflag constant byte address 0x0 - dummy sync flag']
  #allocation33 [shape = 's32[]', space=sflag, size = 0x4, offset = 0, fixed_abs, tag = 'sflag constant byte address 0x0 - dummy sync flag']
  #allocation34 [shape = 's32[]', space=sflag, size = 0x4, offset = 0, fixed_abs, tag = 'sflag constant byte address 0x0 - dummy sync flag']
  #allocation35 [shape = 's32[]', space=sflag, size = 0x4, offset = 0, fixed_abs, tag = 'sflag constant byte address 0x0 - dummy sync flag']
  #allocation36 [shape = 's32[]', space=sflag, size = 0x4, offset = 0, fixed_abs, tag = 'sflag constant byte address 0x0 - dummy sync flag']
  #allocation37 [shape = 's32[]', space=sflag, size = 0x4, offset = 0, fixed_abs, tag = 'sflag constant byte address 0x0 - dummy sync flag']
  #allocation38 [shape = 's32[]', space=sflag, size = 0x4, offset = 0, fixed_abs, tag = 'sflag constant byte address 0x0 - dummy sync flag']
  #allocation39 [shape = 's32[]', space=sflag, size = 0x4, offset = 0, fixed_abs, tag = 'sflag constant byte address 0x0 - dummy sync flag']
  #allocation40 [shape = 's32[]', space=sflag, size = 0x4, offset = 0, fixed_abs, tag = 'sflag constant byte address 0x0 - dummy sync flag']
  #allocation41 [shape = 's32[]', space=sflag, size = 0x4, offset = 0, fixed_abs, tag = 'sflag constant byte address 0x0 - dummy sync flag']
  #allocation42 [shape = 's32[]', space=sflag, size = 0x4, offset = 0, fixed_abs, tag = 'sflag constant byte address 0x0 - dummy sync flag']
  #allocation43 [shape = 's32[]', space=sflag, size = 0x4, offset = 0, fixed_abs, tag = 'sflag constant byte address 0x0 - dummy sync flag']
  %s0 = inlined_call_operand.hbm [shape: s32[2,8], index: 0, kind: input, shape index: {}]
  %s1 = inlined_call_operand.hbm [shape: f32[512,128], index: 1, kind: input, shape index: {}]
  %s2 = inlined_call_operand.hbm [shape: f32[8,128], index: 2, kind: input, shape index: {}]
  %s3 = inlined_call_operand.hbm [shape: f32[2,8,128], index: 3, kind: output, shape index: {}]
  %s4 = sld [smem:[#allocation0]]
  $region113: #{tpu_custom_call.1} parent=0
    _
  %s6 = ssub.s32 1, %s4
  %s7 = scalar_select 0, %s6, %s4
  %9 = dma.hbm_to_smem %s0, 32, [#allocation5], [#allocation4]
  %10 = dma.done [#allocation4], 32
  %11 = sfence
  $region1: #{tpu_custom_call.1} parent=0
    #allocation6 [shape = 'u8[4096]{0}', space=vmem, size = 0x1000, scoped, tag = 'input window, operand 2, single buffered']
    #allocation7 [shape = 's32[2]{0}', space=sflag, size = 0x8, scoped, tag = 'scoped memory for tpu_custom_call.1']
    #allocation8 [shape = 's32[2]{0}', space=sflag, size = 0x8, scoped, tag = 'scoped memory for tpu_custom_call.1']
    #allocation9 [shape = 'u8[8192]{0}', space=vmem, size = 0x2000, scoped, tag = 'output window, operand 0']
    %12 = vsyncpa [#allocation7], 0
    %13 = vsyncpa [#allocation8], 0
    %s14 = scalar_lea.sflag [#allocation8], 1
    %15 = vsyncpa %s14, 0
    loop: start=0, step=1, limit=4
    $region2: #{tpu_custom_call.1} parent=1 // loop_pre_header
      _
    $region3: #{tpu_custom_call.1} parent=1 // loop_header
      %s17 = sphi 0, %s21
      %p18 = scmp.ge.s32.totalorder %s17, 4
      %s25 = sphi 0, %s25
      %s27 = sphi 0, %s25
      %s28 = sphi 0, %s27
      %s42 = sphi 0, %s28
      %s48 = sphi 0, %s50
      %s51 = sphi 0, %s48
      %s52 = sphi 0, %s51
      %s68 = sphi 0, %s52
    $region4: #{tpu_custom_call.1} parent=1 // loop_header_branch
      %20 = sbr.rel (%p18) target = $region8
    $region5: #{tpu_custom_call.1} parent=1 // loop_body
      %s22 = ssub.s32 %s17, 1
      %s23 = ssub.s32 %s17, 2
      %s24 = sadd.s32 %s17, 1
      %s26 = sadd.s32 %s25, 1
      %p29 = scmp.eq.s32.totalorder %s17, 1
      %p30 = scmp.ne.s32.totalorder %s25, %s27
      %p31 = scmp.eq.s32.totalorder %s17, 0
      %p32 = por %p30, %p31
      %p33 = scmp.ne.s32.totalorder %s25, %s27
      %p34 = scmp.eq.s32.totalorder %s22, 1
      %p35 = por %p33, %p34
      %p36 = scmp.ne.s32.totalorder %s27, %s28
      %p37 = scmp.eq.s32.totalorder %s22, 0
      %p38 = por %p36, %p37
      %p39 = scmp.ne.s32.totalorder %s27, %s28
      %p40 = scmp.eq.s32.totalorder %s23, 1
      %p41 = por %p39, %p40
      %p43 = scmp.ne.s32.totalorder %s28, %s42
      %p44 = scmp.eq.s32.totalorder %s23, 0
      %p45 = por %p43, %p44
      %s46 = ssub.s32 %s17, %s24
      %p47 = scmp.eq.s32.totalorder %s46, 0
      %s49 = sadd.s32 %s48, 1
      %s50 = scalar_select %p47, %s48, %s49
      %p53 = pneg %p47
      %p54 = scmp.eq.s32.totalorder %s17, 1
      %p55 = por %p53, %p54
      %p56 = scmp.ne.s32.totalorder %s48, %s51
      %p57 = scmp.eq.s32.totalorder %s17, 0
      %p58 = por %p56, %p57
      %p59 = scmp.ne.s32.totalorder %s48, %s51
      %p60 = scmp.eq.s32.totalorder %s22, 1
      %p61 = por %p59, %p60
      %p62 = scmp.ne.s32.totalorder %s51, %s52
      %p63 = scmp.eq.s32.totalorder %s22, 0
      %p64 = por %p62, %p63
      %p65 = scmp.ne.s32.totalorder %s51, %s52
      %p66 = scmp.eq.s32.totalorder %s23, 1
      %p67 = por %p65, %p66
      %p69 = scmp.ne.s32.totalorder %s52, %s68
      %p70 = scmp.eq.s32.totalorder %s23, 0
      %p71 = por %p69, %p70
      %p72 = scmp.le.s32.totalorder 1, %s17
      %p73 = scmp.lt.s32.totalorder %s17, 3
      %p74 = pnand %p72, %p73
      %p75 = pneg %p74
      // Predicated region
      $region9: #{tpu_custom_call.1} parent=5 // pred_check
        _
      $region10: #{tpu_custom_call.1} parent=5 // pred_check_branch
        %77 = sbr.rel (%p74) target = $region12
      $region11: #{tpu_custom_call.1} parent=5 // pred_region
        %s78 = ssub.s32 %s17, 1
        // Predicated region
        $region13: #{tpu_custom_call.1} parent=11 // pred_check
          %p79 = pneg %p38
        $region14: #{tpu_custom_call.1} parent=11 // pred_check_branch
          %81 = sbr.rel (%p79) target = $region16
        $region15: #{tpu_custom_call.1} parent=11 // pred_region
          %s83 = ssub.s32 128, 128
          %84 = vsyncadd [#allocation7], %s83
          %s86 = sshll.u32 [#allocation6], 4
          %s87 = int_to_ptr.vmem [resolvable:$true] %s86
          %89 = dma.hbm_to_vmem [thread:$0]  %s2, 128, %s87, [#allocation7]
        $region16: #{tpu_custom_call.1} parent=11 // pred_fallthru
          _
      $region12: #{tpu_custom_call.1} parent=5 // pred_fallthru
        _
      %p90 = scmp.lt.s32.totalorder %s17, 2
      // Predicated region
      $region17: #{tpu_custom_call.1} parent=5 // pred_check
        %p91 = pneg %p90
      $region18: #{tpu_custom_call.1} parent=5 // pred_check_branch
        %93 = sbr.rel (%p91) target = $region20
      $region19: #{tpu_custom_call.1} parent=5 // pred_region
        _
      $region20: #{tpu_custom_call.1} parent=5 // pred_fallthru
        _
      %p94 = scmp.le.s32.totalorder 1, %s17
      %p95 = scmp.lt.s32.totalorder %s17, 3
      %p96 = pnand %p94, %p95
      %p97 = pneg %p96
      // Predicated region
      $region21: #{tpu_custom_call.1} parent=5 // pred_check
        _
      $region22: #{tpu_custom_call.1} parent=5 // pred_check_branch
        %99 = sbr.rel (%p96) target = $region24
      $region23: #{tpu_custom_call.1} parent=5 // pred_region
        %s100 = ssub.s32 %s17, 1
        // Predicated region
        $region25: #{tpu_custom_call.1} parent=23 // pred_check
          %p101 = pneg %p38
        $region26: #{tpu_custom_call.1} parent=23 // pred_check_branch
          %103 = sbr.rel (%p101) target = $region28
        $region27: #{tpu_custom_call.1} parent=23 // pred_region
          %104 = dma.done [#allocation7], 128
        $region28: #{tpu_custom_call.1} parent=23 // pred_fallthru
          _
        %p105 = pneg %p38
        %p106 = pneg %p35
        %p107 = pneg %p64
        %p108 = pneg %p61
        %s109 = sand.u32 %s51, 1
        %s110 = scalar_lea.sflag [#allocation8], %s109
        %s111 = sand.u32 %s51, 1
        %s112 = smul.addr %s111, 8
        %s113 = scalar_lea.vmem [#allocation9], %s112
        %p114 = scmp.lt.s32.totalorder %s22, 0
        %s115 = ssub.s32 0, %s22
        %s116 = scalar_select %p114, %s115, %s22
        %s117 = sand.u32 %s116, 1
        %s118 = ssub.s32 0, %s117
        %s119 = scalar_select %p114, %s118, %s117
        %s120 = ssub.s32 1, %s119
        %p121 = scmp.eq.s32.totalorder %s22, 0
        // Predicated region
        $region29: #{tpu_custom_call.1} parent=23 // pred_check
          %p122 = pneg %p121
        $region30: #{tpu_custom_call.1} parent=23 // pred_check_branch
          %124 = sbr.rel (%p122) target = $region32
        $region31: #{tpu_custom_call.1} parent=23 // pred_region
          %s125 = sld [smem:[#allocation5]]
          %s126 = smul.addr %s125, 16
          %s127 = scalar_lea.hbm %s1, %s126
          // Predicated region
          $region33: #{tpu_custom_call.1} parent=31 // pred_check
            _
          $region34: #{tpu_custom_call.1} parent=31 // pred_check_branch
            %129 = sbr.rel target = $region36
          $region35: #{tpu_custom_call.1} parent=31 // pred_region
            %130 = sst [smem:[#allocation12]] [#allocation11]
            %131 = sst [smem:[#allocation13]] [#allocation10]
          $region36: #{tpu_custom_call.1} parent=31 // pred_fallthru
            _
          %133 = shalt.err (0)
          %s135 = sshll.u32 [#allocation2], 4
          %s136 = int_to_ptr.vmem [resolvable:$true] %s135
          %138 = dma.hbm_to_vmem [thread:$0]  %s127, 16, %s136, [#allocation3]
          %s139 = sld [smem:[#allocation5 + $0x1]]
          %s140 = smul.addr %s139, 16
          %s141 = scalar_lea.hbm %s1, %s140
          %s142 = scalar_lea.vmem [#allocation2], 1
          // Predicated region
          $region37: #{tpu_custom_call.1} parent=31 // pred_check
            _
          $region38: #{tpu_custom_call.1} parent=31 // pred_check_branch
            %144 = sbr.rel target = $region40
          $region39: #{tpu_custom_call.1} parent=31 // pred_region
            %145 = sst [smem:[#allocation12]] [#allocation15]
            %146 = sst [smem:[#allocation13]] [#allocation14]
          $region40: #{tpu_custom_call.1} parent=31 // pred_fallthru
            _
          %148 = shalt.err (0)
          %s150 = sshll.u32 %s142, 4
          %s151 = int_to_ptr.vmem [resolvable:$true] %s150
          %153 = dma.hbm_to_vmem [thread:$0]  %s141, 16, %s151, [#allocation3]
          %s154 = sld [smem:[#allocation5 + $0x2]]
          %s155 = smul.addr %s154, 16
          %s156 = scalar_lea.hbm %s1, %s155
          %s157 = scalar_lea.vmem [#allocation2], 2
          // Predicated region
          $region41: #{tpu_custom_call.1} parent=31 // pred_check
            _
          $region42: #{tpu_custom_call.1} parent=31 // pred_check_branch
            %159 = sbr.rel target = $region44
          $region43: #{tpu_custom_call.1} parent=31 // pred_region
            %160 = sst [smem:[#allocation12]] [#allocation17]
            %161 = sst [smem:[#allocation13]] [#allocation16]
          $region44: #{tpu_custom_call.1} parent=31 // pred_fallthru
            _
          %163 = shalt.err (0)
          %s165 = sshll.u32 %s157, 4
          %s166 = int_to_ptr.vmem [resolvable:$true] %s165
          %168 = dma.hbm_to_vmem [thread:$0]  %s156, 16, %s166, [#allocation3]
          %s169 = sld [smem:[#allocation5 + $0x3]]
          %s170 = smul.addr %s169, 16
          %s171 = scalar_lea.hbm %s1, %s170
          %s172 = scalar_lea.vmem [#allocation2], 3
          // Predicated region
          $region45: #{tpu_custom_call.1} parent=31 // pred_check
            _
          $region46: #{tpu_custom_call.1} parent=31 // pred_check_branch
            %174 = sbr.rel target = $region48
          $region47: #{tpu_custom_call.1} parent=31 // pred_region
            %175 = sst [smem:[#allocation12]] [#allocation19]
            %176 = sst [smem:[#allocation13]] [#allocation18]
          $region48: #{tpu_custom_call.1} parent=31 // pred_fallthru
            _
          %178 = shalt.err (0)
          %s180 = sshll.u32 %s172, 4
          %s181 = int_to_ptr.vmem [resolvable:$true] %s180
          %183 = dma.hbm_to_vmem [thread:$0]  %s171, 16, %s181, [#allocation3]
          %s184 = sld [smem:[#allocation5 + $0x4]]
          %s185 = smul.addr %s184, 16
          %s186 = scalar_lea.hbm %s1, %s185
          %s187 = scalar_lea.vmem [#allocation2], 4
          // Predicated region
          $region49: #{tpu_custom_call.1} parent=31 // pred_check
            _
          $region50: #{tpu_custom_call.1} parent=31 // pred_check_branch
            %189 = sbr.rel target = $region52
          $region51: #{tpu_custom_call.1} parent=31 // pred_region
            %190 = sst [smem:[#allocation12]] [#allocation21]
            %191 = sst [smem:[#allocation13]] [#allocation20]
          $region52: #{tpu_custom_call.1} parent=31 // pred_fallthru
            _
          %193 = shalt.err (0)
          %s195 = sshll.u32 %s187, 4
          %s196 = int_to_ptr.vmem [resolvable:$true] %s195
          %198 = dma.hbm_to_vmem [thread:$0]  %s186, 16, %s196, [#allocation3]
          %s199 = sld [smem:[#allocation5 + $0x5]]
          %s200 = smul.addr %s199, 16
          %s201 = scalar_lea.hbm %s1, %s200
          %s202 = scalar_lea.vmem [#allocation2], 5
          // Predicated region
          $region53: #{tpu_custom_call.1} parent=31 // pred_check
            _
          $region54: #{tpu_custom_call.1} parent=31 // pred_check_branch
            %204 = sbr.rel target = $region56
          $region55: #{tpu_custom_call.1} parent=31 // pred_region
            %205 = sst [smem:[#allocation12]] [#allocation23]
            %206 = sst [smem:[#allocation13]] [#allocation22]
          $region56: #{tpu_custom_call.1} parent=31 // pred_fallthru
            _
          %208 = shalt.err (0)
          %s210 = sshll.u32 %s202, 4
          %s211 = int_to_ptr.vmem [resolvable:$true] %s210
          %213 = dma.hbm_to_vmem [thread:$0]  %s201, 16, %s211, [#allocation3]
          %s214 = sld [smem:[#allocation5 + $0x6]]
          %s215 = smul.addr %s214, 16
          %s216 = scalar_lea.hbm %s1, %s215
          %s217 = scalar_lea.vmem [#allocation2], 6
          // Predicated region
          $region57: #{tpu_custom_call.1} parent=31 // pred_check
            _
          $region58: #{tpu_custom_call.1} parent=31 // pred_check_branch
            %219 = sbr.rel target = $region60
          $region59: #{tpu_custom_call.1} parent=31 // pred_region
            %220 = sst [smem:[#allocation12]] [#allocation25]
            %221 = sst [smem:[#allocation13]] [#allocation24]
          $region60: #{tpu_custom_call.1} parent=31 // pred_fallthru
            _
          %223 = shalt.err (0)
          %s225 = sshll.u32 %s217, 4
          %s226 = int_to_ptr.vmem [resolvable:$true] %s225
          %228 = dma.hbm_to_vmem [thread:$0]  %s216, 16, %s226, [#allocation3]
          %s229 = sld [smem:[#allocation5 + $0x7]]
          %s230 = smul.addr %s229, 16
          %s231 = scalar_lea.hbm %s1, %s230
          %s232 = scalar_lea.vmem [#allocation2], 7
          // Predicated region
          $region61: #{tpu_custom_call.1} parent=31 // pred_check
            _
          $region62: #{tpu_custom_call.1} parent=31 // pred_check_branch
            %234 = sbr.rel target = $region64
          $region63: #{tpu_custom_call.1} parent=31 // pred_region
            %235 = sst [smem:[#allocation12]] [#allocation27]
            %236 = sst [smem:[#allocation13]] [#allocation26]
          $region64: #{tpu_custom_call.1} parent=31 // pred_fallthru
            _
          %238 = shalt.err (0)
          %s240 = sshll.u32 %s232, 4
          %s241 = int_to_ptr.vmem [resolvable:$true] %s240
          %243 = dma.hbm_to_vmem [thread:$0]  %s231, 16, %s241, [#allocation3]
        $region32: #{tpu_custom_call.1} parent=23 // pred_fallthru
          _
        %s244 = sadd.s32 %s22, 1
        %p245 = scmp.lt.s32.totalorder %s244, 2
        // Predicated region
        $region65: #{tpu_custom_call.1} parent=23 // pred_check
          %p246 = pneg %p245
        $region66: #{tpu_custom_call.1} parent=23 // pred_check_branch
          %248 = sbr.rel (%p246) target = $region68
        $region67: #{tpu_custom_call.1} parent=23 // pred_region
          %s249 = smul.u32 %s244, 128
          %s250 = sld [smem:[#allocation5 + %s249]]
          %s251 = smul.addr %s250, 16
          %s252 = scalar_lea.hbm %s1, %s251
          %s253 = smul.u32 %s120, 8
          %s254 = scalar_lea.vmem [#allocation2], %s253
          %s255 = scalar_lea.sflag [#allocation3], %s120
          // Predicated region
          $region69: #{tpu_custom_call.1} parent=67 // pred_check
            _
          $region70: #{tpu_custom_call.1} parent=67 // pred_check_branch
            %257 = sbr.rel target = $region72
          $region71: #{tpu_custom_call.1} parent=67 // pred_region
            %258 = sst [smem:[#allocation12]] [#allocation29]
            %259 = sst [smem:[#allocation13]] [#allocation28]
          $region72: #{tpu_custom_call.1} parent=67 // pred_fallthru
            _
          %261 = shalt.err (0)
          %s263 = sshll.u32 %s254, 4
          %s264 = int_to_ptr.vmem [resolvable:$true] %s263
          %266 = dma.hbm_to_vmem [thread:$0]  %s252, 16, %s264, %s255
          %s267 = sadd.s32 %s249, 1
          %s268 = sld [smem:[#allocation5 + %s267]]
          %s269 = smul.addr %s268, 16
          %s270 = scalar_lea.hbm %s1, %s269
          %s271 = sadd.s32 1, %s253
          %s272 = scalar_lea.vmem [#allocation2], %s271
          // Predicated region
          $region73: #{tpu_custom_call.1} parent=67 // pred_check
            _
          $region74: #{tpu_custom_call.1} parent=67 // pred_check_branch
            %274 = sbr.rel target = $region76
          $region75: #{tpu_custom_call.1} parent=67 // pred_region
            %275 = sst [smem:[#allocation12]] [#allocation31]
            %276 = sst [smem:[#allocation13]] [#allocation30]
          $region76: #{tpu_custom_call.1} parent=67 // pred_fallthru
            _
          %278 = shalt.err (0)
          %s280 = sshll.u32 %s272, 4
          %s281 = int_to_ptr.vmem [resolvable:$true] %s280
          %283 = dma.hbm_to_vmem [thread:$0]  %s270, 16, %s281, %s255
          %s284 = sadd.s32 %s249, 2
          %s285 = sld [smem:[#allocation5 + %s284]]
          %s286 = smul.addr %s285, 16
          %s287 = scalar_lea.hbm %s1, %s286
          %s288 = sadd.s32 2, %s253
          %s289 = scalar_lea.vmem [#allocation2], %s288
          // Predicated region
          $region77: #{tpu_custom_call.1} parent=67 // pred_check
            _
          $region78: #{tpu_custom_call.1} parent=67 // pred_check_branch
            %291 = sbr.rel target = $region80
          $region79: #{tpu_custom_call.1} parent=67 // pred_region
            %292 = sst [smem:[#allocation12]] [#allocation33]
            %293 = sst [smem:[#allocation13]] [#allocation32]
          $region80: #{tpu_custom_call.1} parent=67 // pred_fallthru
            _
          %295 = shalt.err (0)
          %s297 = sshll.u32 %s289, 4
          %s298 = int_to_ptr.vmem [resolvable:$true] %s297
          %300 = dma.hbm_to_vmem [thread:$0]  %s287, 16, %s298, %s255
          %s301 = sadd.s32 %s249, 3
          %s302 = sld [smem:[#allocation5 + %s301]]
          %s303 = smul.addr %s302, 16
          %s304 = scalar_lea.hbm %s1, %s303
          %s305 = sadd.s32 3, %s253
          %s306 = scalar_lea.vmem [#allocation2], %s305
          // Predicated region
          $region81: #{tpu_custom_call.1} parent=67 // pred_check
            _
          $region82: #{tpu_custom_call.1} parent=67 // pred_check_branch
            %308 = sbr.rel target = $region84
          $region83: #{tpu_custom_call.1} parent=67 // pred_region
            %309 = sst [smem:[#allocation12]] [#allocation35]
            %310 = sst [smem:[#allocation13]] [#allocation34]
          $region84: #{tpu_custom_call.1} parent=67 // pred_fallthru
            _
          %312 = shalt.err (0)
          %s314 = sshll.u32 %s306, 4
          %s315 = int_to_ptr.vmem [resolvable:$true] %s314
          %317 = dma.hbm_to_vmem [thread:$0]  %s304, 16, %s315, %s255
          %s318 = sadd.s32 %s249, 4
          %s319 = sld [smem:[#allocation5 + %s318]]
          %s320 = smul.addr %s319, 16
          %s321 = scalar_lea.hbm %s1, %s320
          %s322 = sadd.s32 4, %s253
          %s323 = scalar_lea.vmem [#allocation2], %s322
          // Predicated region
          $region85: #{tpu_custom_call.1} parent=67 // pred_check
            _
          $region86: #{tpu_custom_call.1} parent=67 // pred_check_branch
            %325 = sbr.rel target = $region88
          $region87: #{tpu_custom_call.1} parent=67 // pred_region
            %326 = sst [smem:[#allocation12]] [#allocation37]
            %327 = sst [smem:[#allocation13]] [#allocation36]
          $region88: #{tpu_custom_call.1} parent=67 // pred_fallthru
            _
          %329 = shalt.err (0)
          %s331 = sshll.u32 %s323, 4
          %s332 = int_to_ptr.vmem [resolvable:$true] %s331
          %334 = dma.hbm_to_vmem [thread:$0]  %s321, 16, %s332, %s255
          %s335 = sadd.s32 %s249, 5
          %s336 = sld [smem:[#allocation5 + %s335]]
          %s337 = smul.addr %s336, 16
          %s338 = scalar_lea.hbm %s1, %s337
          %s339 = sadd.s32 5, %s253
          %s340 = scalar_lea.vmem [#allocation2], %s339
          // Predicated region
          $region89: #{tpu_custom_call.1} parent=67 // pred_check
            _
          $region90: #{tpu_custom_call.1} parent=67 // pred_check_branch
            %342 = sbr.rel target = $region92
          $region91: #{tpu_custom_call.1} parent=67 // pred_region
            %343 = sst [smem:[#allocation12]] [#allocation39]
            %344 = sst [smem:[#allocation13]] [#allocation38]
          $region92: #{tpu_custom_call.1} parent=67 // pred_fallthru
            _
          %346 = shalt.err (0)
          %s348 = sshll.u32 %s340, 4
          %s349 = int_to_ptr.vmem [resolvable:$true] %s348
          %351 = dma.hbm_to_vmem [thread:$0]  %s338, 16, %s349, %s255
          %s352 = sadd.s32 %s249, 6
          %s353 = sld [smem:[#allocation5 + %s352]]
          %s354 = smul.addr %s353, 16
          %s355 = scalar_lea.hbm %s1, %s354
          %s356 = sadd.s32 6, %s253
          %s357 = scalar_lea.vmem [#allocation2], %s356
          // Predicated region
          $region93: #{tpu_custom_call.1} parent=67 // pred_check
            _
          $region94: #{tpu_custom_call.1} parent=67 // pred_check_branch
            %359 = sbr.rel target = $region96
          $region95: #{tpu_custom_call.1} parent=67 // pred_region
            %360 = sst [smem:[#allocation12]] [#allocation41]
            %361 = sst [smem:[#allocation13]] [#allocation40]
          $region96: #{tpu_custom_call.1} parent=67 // pred_fallthru
            _
          %363 = shalt.err (0)
          %s365 = sshll.u32 %s357, 4
          %s366 = int_to_ptr.vmem [resolvable:$true] %s365
          %368 = dma.hbm_to_vmem [thread:$0]  %s355, 16, %s366, %s255
          %s369 = sadd.s32 %s249, 7
          %s370 = sld [smem:[#allocation5 + %s369]]
          %s371 = smul.addr %s370, 16
          %s372 = scalar_lea.hbm %s1, %s371
          %s373 = sadd.s32 7, %s253
          %s374 = scalar_lea.vmem [#allocation2], %s373
          // Predicated region
          $region97: #{tpu_custom_call.1} parent=67 // pred_check
            _
          $region98: #{tpu_custom_call.1} parent=67 // pred_check_branch
            %376 = sbr.rel target = $region100
          $region99: #{tpu_custom_call.1} parent=67 // pred_region
            %377 = sst [smem:[#allocation12]] [#allocation43]
            %378 = sst [smem:[#allocation13]] [#allocation42]
          $region100: #{tpu_custom_call.1} parent=67 // pred_fallthru
            _
          %380 = shalt.err (0)
          %s382 = sshll.u32 %s374, 4
          %s383 = int_to_ptr.vmem [resolvable:$true] %s382
          %385 = dma.hbm_to_vmem [thread:$0]  %s372, 16, %s383, %s255
        $region68: #{tpu_custom_call.1} parent=23 // pred_fallthru
          _
        %s386 = smul.u32 %s119, 8
        %s387 = scalar_lea.vmem [#allocation2], %s386
        %s388 = scalar_lea.sflag [#allocation3], %s119
        %s389 = smul.u32 8, 1
        %s390 = sshll.u32 %s389, 4
        %391 = dma.done %s388, %s390
        %v392 = vld [vmem:[%s387] sm:$0xff]
        %v393 = vld [vmem:[#allocation6] sm:$0xff]
        %v394 = vadd.f32 %v392, %v393
        %395 = vst [vmem:[%s113] sm:$0xff] %v394
        %s396 = sand.u32 %s51, 1
        %s397 = scalar_lea.sflag [#allocation8], %s396
        %s398 = sand.u32 %s51, 1
        %s399 = smul.addr %s398, 8
        %s400 = scalar_lea.vmem [#allocation9], %s399
        // Predicated region
        $region101: #{tpu_custom_call.1} parent=23 // pred_check
          %p401 = pneg %p61
        $region102: #{tpu_custom_call.1} parent=23 // pred_check_branch
          %403 = sbr.rel (%p401) target = $region104
        $region103: #{tpu_custom_call.1} parent=23 // pred_region
          %s405 = ssub.s32 128, 128
          %406 = vsyncadd %s397, %s405
          %s407 = smul.addr %s22, 128
          %s408 = scalar_lea.hbm %s3, %s407
          %s410 = sshll.u32 %s400, 4
          %s411 = int_to_ptr.vmem [resolvable:$true] %s410
          %413 = dma.vmem_to_hbm [thread:$0]  %s411, 128, %s408, %s397
        $region104: #{tpu_custom_call.1} parent=23 // pred_fallthru
          _
      $region24: #{tpu_custom_call.1} parent=5 // pred_fallthru
        _
      %p414 = scmp.le.s32.totalorder 2, %s17
      // Predicated region
      $region105: #{tpu_custom_call.1} parent=5 // pred_check
        %p415 = pneg %p414
      $region106: #{tpu_custom_call.1} parent=5 // pred_check_branch
        %417 = sbr.rel (%p415) target = $region108
      $region107: #{tpu_custom_call.1} parent=5 // pred_region
        %s418 = ssub.s32 %s17, 2
        // Predicated region
        $region109: #{tpu_custom_call.1} parent=107 // pred_check
          %p419 = pneg %p67
        $region110: #{tpu_custom_call.1} parent=107 // pred_check_branch
          %421 = sbr.rel (%p419) target = $region112
        $region111: #{tpu_custom_call.1} parent=107 // pred_region
          %s422 = sand.u32 %s52, 1
          %s423 = scalar_lea.sflag [#allocation8], %s422
          %s424 = sand.u32 %s52, 1
          %s425 = smul.addr %s424, 8
          %s426 = scalar_lea.vmem [#allocation9], %s425
          %427 = dma.done %s423, 128
        $region112: #{tpu_custom_call.1} parent=107 // pred_fallthru
          _
      $region108: #{tpu_custom_call.1} parent=5 // pred_fallthru
        _
    $region6: #{tpu_custom_call.1} parent=1 // loop_footer
      %s21 = sadd.s32 1, %s17
    $region7: #{tpu_custom_call.1} parent=1 // loop_footer_branch
      %16 = sbr.rel target = $region3
    $region8: #{tpu_custom_call.1} parent=1 // loop_exit
      _
    %428 = vsyncpa [#allocation7], 1
    %s429 = scalar_lea.sflag [#allocation7], 1
    %430 = vsyncpa %s429, 1
    %431 = vsyncpa [#allocation8], 1
    %s432 = scalar_lea.sflag [#allocation8], 1
    %433 = vsyncpa %s432, 1
  %434 = vsyncmov [#allocation3]
  %s435 = vpop.sfrf %434
  %p436 = scmp.eq.s32.totalorder %s435, 0
  %p437 = pneg %p436
  %439 = shalt.err (%p437)
  %s440 = scalar_lea.sflag [#allocation3], 1
  %441 = vsyncmov %s440
  %s442 = vpop.sfrf %441
  %p443 = scmp.eq.s32.totalorder %s442, 0
  %p444 = pneg %p443
  %446 = shalt.err (%p444)

</llo_original>
